<compile_context>
chip_gen: v7x
topology: tpu7x:2x2x1
jax: 0.10.0
libtpu: 0.0.40
codegen_flags: <defaults>
</compile_context>

<pallas_src>
import functools

import jax
import jax.numpy as jnp
from jax.experimental import pallas as pl
from jax.experimental.pallas import tpu as pltpu

HIDDEN = 128
LANE = 128


def _dqn_kernel(x_ref, w1_ref, b1_ref, w2_ref, b2_ref, w3_ref, b3_ref, o_ref):
    n_obs = x_ref.shape[1]
    n_act = o_ref.shape[1]

    # Layer 1 on the VPU in f32: h1 = relu(x @ w1 + b1) as n_obs broadcast MACs.
    x = x_ref[...]          # (tile_b, n_obs) f32
    w1 = w1_ref[...]        # (n_obs, HIDDEN) f32
    h1 = b1_ref[...]        # (1, HIDDEN) f32, broadcasts over batch
    for k in range(n_obs):  # static unroll, n_obs == 4
        h1 = h1 + x[:, k:k + 1] * w1[k:k + 1, :]
    h1 = jnp.maximum(h1, 0.0)

    # Layer 2 on the MXU: bf16 operands, f32 accumulation; bias+ReLU in f32.
    h2 = jnp.dot(h1.astype(jnp.bfloat16), w2_ref[...],
                 preferred_element_type=jnp.float32)
    h2 = jnp.maximum(h2 + b2_ref[...], 0.0)

    # Layer 3 on the MXU with a lane-dense (128-wide) result; store only the
    # real n_actions columns (tiny masked store, no wrapper-side slice needed).
    o = jnp.dot(h2.astype(jnp.bfloat16), w3_ref[...],
                preferred_element_type=jnp.float32)
    o = o + b3_ref[...]
    o_ref[...] = o[:, :n_act].astype(o_ref.dtype)


def prepare_params(params, n_observations, n_actions):
    """One-time cast / padding of the weights (hoisted out of the hot path).

    Weights are stored transposed vs PyTorch nn.Linear: W_k is [in, out], so the
    kernel computes y = x @ W + b == PyTorch's x @ W_pt.T + b.
    """
    w1, b1, w2, b2, w3, b3 = params
    assert w1.shape == (n_observations, HIDDEN)
    assert w2.shape == (HIDDEN, HIDDEN)
    assert w3.shape == (HIDDEN, n_actions)
    assert n_actions <= LANE

    w1_p = w1.astype(jnp.float32)                       # layer 1 stays f32 (VPU)
    b1_p = b1.reshape(1, HIDDEN).astype(jnp.float32)
    w2_p = w2.astype(jnp.bfloat16)
    b2_p = b2.reshape(1, HIDDEN).astype(jnp.float32)
    # Lane-dense layer-3: pad output columns to 128 once (zero columns).
    w3_p = jnp.pad(w3.astype(jnp.bfloat16), ((0, 0), (0, LANE - n_actions)))
    b3_p = jnp.pad(b3.astype(jnp.float32), (0, LANE - n_actions)).reshape(1, LANE)
    return (w1_p, b1_p, w2_p, b2_p, w3_p, b3_p)


@functools.partial(jax.jit, static_argnames=("n_actions", "tile_b"))
def dqn_forward(x, padded_params, n_actions, tile_b=None):
    """Fused 3-layer MLP forward in one Pallas kernel.

    tile_b=None (or >= B) -> single-block call (inference path, grid=(1,)).
    tile_b dividing B     -> batch grid, weights resident, parallel over cores.
    """
    w1_p, b1_p, w2_p, b2_p, w3_p, b3_p = padded_params
    B, n_obs = x.shape

    if tile_b is None or tile_b >= B or B % tile_b != 0:
        tile_b = B
    num_tiles = B // tile_b

    x_spec = pl.BlockSpec((tile_b, n_obs), lambda i: (i, 0))
    resident = lambda shape: pl.BlockSpec(shape, lambda i: (0, 0))
    out_spec = pl.BlockSpec((tile_b, n_actions), lambda i: (i, 0))

    return pl.pallas_call(
        _dqn_kernel,
        out_shape=jax.ShapeDtypeStruct((B, n_actions), jnp.float32),
        grid=(num_tiles,),
        in_specs=[
            x_spec,
            resident(w1_p.shape), resident(b1_p.shape),
            resident(w2_p.shape), resident(b2_p.shape),
            resident(w3_p.shape), resident(b3_p.shape),
        ],
        out_specs=out_spec,
        compiler_params=pltpu.CompilerParams(
            dimension_semantics=("parallel",)),  # v7x: shard batch over both TCs
    )(x, w1_p, b1_p, w2_p, b2_p, w3_p, b3_p)


def init_dqn_params(key, n_observations, n_actions):
    """Deterministic init mimicking nn.Linear's U(-1/sqrt(fan_in), 1/sqrt(fan_in))."""
    ks = jax.random.split(key, 6)

    def linear(kw, kb, fan_in, fan_out):
        bound = 1.0 / jnp.sqrt(fan_in)
        w = jax.random.uniform(kw, (fan_in, fan_out), jnp.float32, -bound, bound)
        b = jax.random.uniform(kb, (fan_out,), jnp.float32, -bound, bound)
        return w, b

    w1, b1 = linear(ks[0], ks[1], n_observations, HIDDEN)
    w2, b2 = linear(ks[2], ks[3], HIDDEN, HIDDEN)
    w3, b3 = linear(ks[4], ks[5], HIDDEN, n_actions)
    return (w1, b1, w2, b2, w3, b3)


def dqn_reference_f32(x, params):
    """Plain-JAX f32 reference of the PyTorch forward."""
    w1, b1, w2, b2, w3, b3 = params
    h = jnp.maximum(x @ w1 + b1, 0.0)
    h = jnp.maximum(h @ w2 + b2, 0.0)
    return h @ w3 + b3


def dqn_reference_kernel_math(x, params):
    """Reference matching the kernel's math: f32 layer 1, bf16/f32-acc layers 2-3."""
    w1, b1, w2, b2, w3, b3 = params
    dot = lambda a, w: jnp.dot(a.astype(jnp.bfloat16), w.astype(jnp.bfloat16),
                               preferred_element_type=jnp.float32)
    h = jnp.maximum(x @ w1 + b1, 0.0)
    h = jnp.maximum(dot(h, w2) + b2, 0.0)
    return dot(h, w3) + b3


if __name__ == "__main__":
    # CartPole-v1: n_observations = 4, n_actions = 2.
    n_observations, n_actions = 4, 2

    key = jax.random.PRNGKey(0)
    k_param, k_x, k_xb = jax.random.split(key, 3)
    params = init_dqn_params(k_param, n_observations, n_actions)
    padded_params = prepare_params(params, n_observations, n_actions)

    # --- Inference-size batch (single block, no wrapper pad/cast/slice) ---
    batch = 2
    x = jax.random.normal(k_x, (batch, n_observations), jnp.float32)
    out = jax.block_until_ready(dqn_forward(x, padded_params, n_actions))
    assert out.shape == (batch, n_actions)

    ref_k = dqn_reference_kernel_math(x, params)
    ref_f = dqn_reference_f32(x, params)
    assert jnp.allclose(out, ref_k, atol=5e-3, rtol=5e-3), "mismatch vs kernel-math reference"
    assert jnp.allclose(out, ref_f, atol=2e-2, rtol=2e-2), "mismatch vs f32 reference"

    # --- Replay-size batch (batch grid, TILE_B=256, parallel over TensorCores) ---
    batch_big = 512
    xb = jax.random.normal(k_xb, (batch_big, n_observations), jnp.float32)
    out_b = jax.block_until_ready(dqn_forward(xb, padded_params, n_actions, tile_b=256))
    assert out_b.shape == (batch_big, n_actions)
    assert jnp.allclose(out_b, dqn_reference_f32(xb, params), atol=2e-2, rtol=2e-2), \
        "mismatch vs f32 reference (batched path)"

    print("KERNEL_OK")
</pallas_src>

<mosaic_0001>
module attributes {stable_mosaic.version = 11 : i64} {
  func.func @_dqn_kernel(%arg0: i32, %arg1: memref<2x4xf32, #tpu.memory_space<vmem>>, %arg2: memref<4x128xf32, #tpu.memory_space<vmem>>, %arg3: memref<1x128xf32, #tpu.memory_space<vmem>>, %arg4: memref<128x128xbf16, #tpu.memory_space<vmem>>, %arg5: memref<1x128xf32, #tpu.memory_space<vmem>>, %arg6: memref<128x128xbf16, #tpu.memory_space<vmem>>, %arg7: memref<1x128xf32, #tpu.memory_space<vmem>>, %arg8: memref<2x2xf32, #tpu.memory_space<vmem>>) attributes {dimension_semantics = [#tpu.dimension_semantics<parallel>], iteration_bounds = array<i64: 1>, scalar_prefetch = 0 : i64, scratch_operands = 0 : i64, tpu.core_type = #tpu.core_type<tc>, window_params = [{transform_indices = @transform_0, window_bounds = array<i64: 2, 4>}, {pipeline_mode = #tpu.pipeline_mode<synchronous>, transform_indices = @transform_1, window_bounds = array<i64: 4, 128>}, {pipeline_mode = #tpu.pipeline_mode<synchronous>, transform_indices = @transform_2, window_bounds = array<i64: 1, 128>}, {pipeline_mode = #tpu.pipeline_mode<synchronous>, transform_indices = @transform_3, window_bounds = array<i64: 128, 128>}, {pipeline_mode = #tpu.pipeline_mode<synchronous>, transform_indices = @transform_4, window_bounds = array<i64: 1, 128>}, {pipeline_mode = #tpu.pipeline_mode<synchronous>, transform_indices = @transform_5, window_bounds = array<i64: 128, 128>}, {pipeline_mode = #tpu.pipeline_mode<synchronous>, transform_indices = @transform_6, window_bounds = array<i64: 1, 128>}, {transform_indices = @transform_7, window_bounds = array<i64: 2, 2>}]} {
    %c0 = arith.constant 0 : index
    %c0_0 = arith.constant 0 : index
    %0 = vector.load %arg1[%c0, %c0_0] : memref<2x4xf32, #tpu.memory_space<vmem>>, vector<2x4xf32>
    %c0_1 = arith.constant 0 : index
    %c0_2 = arith.constant 0 : index
    %1 = vector.load %arg2[%c0_1, %c0_2] : memref<4x128xf32, #tpu.memory_space<vmem>>, vector<4x128xf32>
    %c0_3 = arith.constant 0 : index
    %c0_4 = arith.constant 0 : index
    %2 = vector.load %arg3[%c0_3, %c0_4] : memref<1x128xf32, #tpu.memory_space<vmem>>, vector<1x128xf32>
    %3 = vector.extract_strided_slice %0 {offsets = [0, 0], sizes = [2, 1], strides = [1, 1]} : vector<2x4xf32> to vector<2x1xf32>
    %4 = vector.extract_strided_slice %1 {offsets = [0, 0], sizes = [1, 128], strides = [1, 1]} : vector<4x128xf32> to vector<1x128xf32>
    %5 = vector.broadcast %3 : vector<2x1xf32> to vector<2x128xf32>
    %6 = vector.broadcast %4 : vector<1x128xf32> to vector<2x128xf32>
    %7 = arith.mulf %5, %6 : vector<2x128xf32>
    %8 = vector.broadcast %2 : vector<1x128xf32> to vector<2x128xf32>
    %9 = arith.addf %8, %7 : vector<2x128xf32>
    %10 = vector.extract_strided_slice %0 {offsets = [0, 1], sizes = [2, 1], strides = [1, 1]} : vector<2x4xf32> to vector<2x1xf32>
    %11 = vector.extract_strided_slice %1 {offsets = [1, 0], sizes = [1, 128], strides = [1, 1]} : vector<4x128xf32> to vector<1x128xf32>
    %12 = vector.broadcast %10 : vector<2x1xf32> to vector<2x128xf32>
    %13 = vector.broadcast %11 : vector<1x128xf32> to vector<2x128xf32>
    %14 = arith.mulf %12, %13 : vector<2x128xf32>
    %15 = arith.addf %9, %14 : vector<2x128xf32>
    %16 = vector.extract_strided_slice %0 {offsets = [0, 2], sizes = [2, 1], strides = [1, 1]} : vector<2x4xf32> to vector<2x1xf32>
    %17 = vector.extract_strided_slice %1 {offsets = [2, 0], sizes = [1, 128], strides = [1, 1]} : vector<4x128xf32> to vector<1x128xf32>
    %18 = vector.broadcast %16 : vector<2x1xf32> to vector<2x128xf32>
    %19 = vector.broadcast %17 : vector<1x128xf32> to vector<2x128xf32>
    %20 = arith.mulf %18, %19 : vector<2x128xf32>
    %21 = arith.addf %15, %20 : vector<2x128xf32>
    %22 = vector.extract_strided_slice %0 {offsets = [0, 3], sizes = [2, 1], strides = [1, 1]} : vector<2x4xf32> to vector<2x1xf32>
    %23 = vector.extract_strided_slice %1 {offsets = [3, 0], sizes = [1, 128], strides = [1, 1]} : vector<4x128xf32> to vector<1x128xf32>
    %24 = vector.broadcast %22 : vector<2x1xf32> to vector<2x128xf32>
    %25 = vector.broadcast %23 : vector<1x128xf32> to vector<2x128xf32>
    %26 = arith.mulf %24, %25 : vector<2x128xf32>
    %27 = arith.addf %21, %26 : vector<2x128xf32>
    %cst = arith.constant 0.000000e+00 : f32
    %28 = vector.broadcast %cst : f32 to vector<2x128xf32>
    %29 = arith.maximumf %27, %28 : vector<2x128xf32>
    %30 = arith.truncf %29 : vector<2x128xf32> to vector<2x128xbf16>
    %c0_5 = arith.constant 0 : index
    %c0_6 = arith.constant 0 : index
    %31 = vector.load %arg4[%c0_5, %c0_6] : memref<128x128xbf16, #tpu.memory_space<vmem>>, vector<128x128xbf16>
    %cst_7 = arith.constant dense<0.000000e+00> : vector<2x128xf32>
    %32 = tpu.matmul %30, %31, %cst_7 {dimension_numbers = #tpu.dot_dimension_numbers<[1], [0], [0], [1], [0, 0, 1, 1], [], []>} : vector<2x128xbf16>, vector<128x128xbf16>, vector<2x128xf32> -> vector<2x128xf32>
    %c0_8 = arith.constant 0 : index
    %c0_9 = arith.constant 0 : index
    %33 = vector.load %arg5[%c0_8, %c0_9] : memref<1x128xf32, #tpu.memory_space<vmem>>, vector<1x128xf32>
    %34 = vector.broadcast %33 : vector<1x128xf32> to vector<2x128xf32>
    %35 = arith.addf %32, %34 : vector<2x128xf32>
    %cst_10 = arith.constant 0.000000e+00 : f32
    %36 = vector.broadcast %cst_10 : f32 to vector<2x128xf32>
    %37 = arith.maximumf %35, %36 : vector<2x128xf32>
    %38 = arith.truncf %37 : vector<2x128xf32> to vector<2x128xbf16>
    %c0_11 = arith.constant 0 : index
    %c0_12 = arith.constant 0 : index
    %39 = vector.load %arg6[%c0_11, %c0_12] : memref<128x128xbf16, #tpu.memory_space<vmem>>, vector<128x128xbf16>
    %cst_13 = arith.constant dense<0.000000e+00> : vector<2x128xf32>
    %40 = tpu.matmul %38, %39, %cst_13 {dimension_numbers = #tpu.dot_dimension_numbers<[1], [0], [0], [1], [0, 0, 1, 1], [], []>} : vector<2x128xbf16>, vector<128x128xbf16>, vector<2x128xf32> -> vector<2x128xf32>
    %c0_14 = arith.constant 0 : index
    %c0_15 = arith.constant 0 : index
    %41 = vector.load %arg7[%c0_14, %c0_15] : memref<1x128xf32, #tpu.memory_space<vmem>>, vector<1x128xf32>
    %42 = vector.broadcast %41 : vector<1x128xf32> to vector<2x128xf32>
    %43 = arith.addf %40, %42 : vector<2x128xf32>
    %44 = vector.extract_strided_slice %43 {offsets = [0, 0], sizes = [2, 2], strides = [1, 1]} : vector<2x128xf32> to vector<2x2xf32>
    %c0_16 = arith.constant 0 : index
    %c0_17 = arith.constant 0 : index
    %45 = vector.load %arg8[%c0_16, %c0_17] : memref<2x2xf32, #tpu.memory_space<vmem>>, vector<2x2xf32>
    tpu.vector_store %arg8[%c0_16, %c0_17], %44 {strides = array<i32>} : memref<2x2xf32, #tpu.memory_space<vmem>>, vector<2x2xf32>,
    return
  }
  func.func @transform_0(%arg0: i32) -> (i32, i32) {
    %c0_i32 = arith.constant 0 : i32
    %c0_i32_0 = arith.constant 0 : i32
    return %arg0, %c0_i32 : i32, i32
  }
  func.func @transform_1(%arg0: i32) -> (i32, i32) {
    %c0_i32 = arith.constant 0 : i32
    %c0_i32_0 = arith.constant 0 : i32
    %c0_i32_1 = arith.constant 0 : i32
    return %c0_i32, %c0_i32_0 : i32, i32
  }
  func.func @transform_2(%arg0: i32) -> (i32, i32) {
    %c0_i32 = arith.constant 0 : i32
    %c0_i32_0 = arith.constant 0 : i32
    %c0_i32_1 = arith.constant 0 : i32
    return %c0_i32, %c0_i32_0 : i32, i32
  }
  func.func @transform_3(%arg0: i32) -> (i32, i32) {
    %c0_i32 = arith.constant 0 : i32
    %c0_i32_0 = arith.constant 0 : i32
    %c0_i32_1 = arith.constant 0 : i32
    return %c0_i32, %c0_i32_0 : i32, i32
  }
  func.func @transform_4(%arg0: i32) -> (i32, i32) {
    %c0_i32 = arith.constant 0 : i32
    %c0_i32_0 = arith.constant 0 : i32
    %c0_i32_1 = arith.constant 0 : i32
    return %c0_i32, %c0_i32_0 : i32, i32
  }
  func.func @transform_5(%arg0: i32) -> (i32, i32) {
    %c0_i32 = arith.constant 0 : i32
    %c0_i32_0 = arith.constant 0 : i32
    %c0_i32_1 = arith.constant 0 : i32
    return %c0_i32, %c0_i32_0 : i32, i32
  }
  func.func @transform_6(%arg0: i32) -> (i32, i32) {
    %c0_i32 = arith.constant 0 : i32
    %c0_i32_0 = arith.constant 0 : i32
    %c0_i32_1 = arith.constant 0 : i32
    return %c0_i32, %c0_i32_0 : i32, i32
  }
  func.func @transform_7(%arg0: i32) -> (i32, i32) {
    %c0_i32 = arith.constant 0 : i32
    %c0_i32_0 = arith.constant 0 : i32
    return %arg0, %c0_i32 : i32, i32
  }
}

</mosaic_0001>

<llo_original>
// kernel: dqn_forward.1
$region0: #{dqn_forward.1}
  #allocation0 [shape = 'u32[]', space=smem, size = 0x4, offset = 0x4, fixed_abs, tag = 'smem constant byte address 0x4 - core index']
  #allocation1 [shape = 'u32[144,128]{1,0:T(1,128)}', space=vmem, size = 0x12000, scoped, tag = 'internal scratch']
  %s0 = inlined_call_operand.hbm [shape: f32[2,4], index: 0, kind: input, shape index: {}]
  %s1 = inlined_call_operand.hbm [shape: f32[4,128], index: 1, kind: input, shape index: {}]
  %s2 = inlined_call_operand.vmem [shape: f32[1,128], index: 2, kind: input, shape index: {}]
  %s3 = inlined_call_operand.hbm [shape: bf16[128,128], index: 3, kind: input, shape index: {}]
  %s4 = inlined_call_operand.vmem [shape: f32[1,128], index: 4, kind: input, shape index: {}]
  %s5 = inlined_call_operand.hbm [shape: bf16[128,128], index: 5, kind: input, shape index: {}]
  %s6 = inlined_call_operand.vmem [shape: f32[1,128], index: 6, kind: input, shape index: {}]
  %s7 = inlined_call_operand.hbm [shape: f32[2,2], index: 7, kind: output, shape index: {}]
  %s8 = sld [smem:[#allocation0]]
  $region54: #{dqn_forward.1} parent=0
    _
  %s10 = ssub.s32 1, %s8
  %s11 = scalar_select 0, %s10, %s8
  $region1: #{dqn_forward.1} parent=0
    #allocation2 [shape = 'u8[1024]{0}', space=vmem, size = 0x400, scoped, tag = 'input window, operand 0, single buffered']
    #allocation3 [shape = 's32[1]{0}', space=sflag, size = 0x4, scoped, tag = 'scoped memory for dqn_forward.1']
    #allocation4 [shape = 's32[1]{0}', space=sflag, size = 0x4, scoped, tag = 'scoped memory for dqn_forward.1']
    #allocation5 [shape = 'u8[2048]{0}', space=vmem, size = 0x800, scoped, tag = 'input window, operand 1, single buffered']
    #allocation6 [shape = 's32[1]{0}', space=sflag, size = 0x4, scoped, tag = 'scoped memory for dqn_forward.1']
    #allocation7 [shape = 'u8[32768]{0}', space=vmem, size = 0x8000, scoped, tag = 'input window, operand 3, single buffered']
    #allocation8 [shape = 'u8[32768]{0}', space=vmem, size = 0x8000, scoped, tag = 'input window, operand 5, single buffered']
    #allocation9 [shape = 's32[1]{0}', space=sflag, size = 0x4, scoped, tag = 'scoped memory for dqn_forward.1']
    #allocation10 [shape = 'u8[1024]{0}', space=vmem, size = 0x400, scoped, tag = 'output window, operand 0, single buffered']
    %12 = vsyncpa [#allocation3], 0
    %13 = vsyncpa [#allocation6], 0
    %14 = vsyncpa [#allocation9], 0
    %15 = vsyncpa [#allocation4], 0
    // Predicated region
    $region2: #{dqn_forward.1} parent=1 // pred_check
      _
    $region3: #{dqn_forward.1} parent=1 // pred_check_branch
      %17 = sbr.rel (0) target = $region5
    $region4: #{dqn_forward.1} parent=1 // pred_region
      %s19 = ssub.s32 32, 32
      %20 = vsyncadd [#allocation3], %s19
      %s22 = sshll.u32 [#allocation2], 4
      %s23 = int_to_ptr.vmem [resolvable:$true] %s22
      %25 = dma.hbm_to_vmem [thread:$0]  %s0, 32, %s23, [#allocation3]
    $region5: #{dqn_forward.1} parent=1 // pred_fallthru
      _
    // Predicated region
    $region6: #{dqn_forward.1} parent=1 // pred_check
      _
    $region7: #{dqn_forward.1} parent=1 // pred_check_branch
      %27 = sbr.rel (0) target = $region9
    $region8: #{dqn_forward.1} parent=1 // pred_region
      %s29 = ssub.s32 64, 64
      %30 = vsyncadd [#allocation6], %s29
      %s32 = sshll.u32 [#allocation5], 4
      %s33 = int_to_ptr.vmem [resolvable:$true] %s32
      %35 = dma.hbm_to_vmem [thread:$0]  %s1, 64, %s33, [#allocation6]
    $region9: #{dqn_forward.1} parent=1 // pred_fallthru
      _
    // Predicated region
    $region10: #{dqn_forward.1} parent=1 // pred_check
      _
    $region11: #{dqn_forward.1} parent=1 // pred_check_branch
      %37 = sbr.rel (0) target = $region13
    $region12: #{dqn_forward.1} parent=1 // pred_region
      _
    $region13: #{dqn_forward.1} parent=1 // pred_fallthru
      _
    // Predicated region
    $region14: #{dqn_forward.1} parent=1 // pred_check
      _
    $region15: #{dqn_forward.1} parent=1 // pred_check_branch
      %39 = sbr.rel (0) target = $region17
    $region16: #{dqn_forward.1} parent=1 // pred_region
      %s41 = ssub.s32 1024, 1024
      %42 = vsyncadd [#allocation6], %s41
      %s43 = sshll.u32 [#allocation7], 4
      %s44 = int_to_ptr.vmem [resolvable:$true] %s43
      %49 = dma.hbm_to_vmem [thread:$0]  %s3, 1024, %s44, [#allocation6], 64, 64, 4
    $region17: #{dqn_forward.1} parent=1 // pred_fallthru
      _
    // Predicated region
    $region18: #{dqn_forward.1} parent=1 // pred_check
      _
    $region19: #{dqn_forward.1} parent=1 // pred_check_branch
      %51 = sbr.rel (0) target = $region21
    $region20: #{dqn_forward.1} parent=1 // pred_region
      _
    $region21: #{dqn_forward.1} parent=1 // pred_fallthru
      _
    // Predicated region
    $region22: #{dqn_forward.1} parent=1 // pred_check
      _
    $region23: #{dqn_forward.1} parent=1 // pred_check_branch
      %53 = sbr.rel (0) target = $region25
    $region24: #{dqn_forward.1} parent=1 // pred_region
      %s55 = ssub.s32 1024, 1024
      %56 = vsyncadd [#allocation9], %s55
      %s57 = sshll.u32 [#allocation8], 4
      %s58 = int_to_ptr.vmem [resolvable:$true] %s57
      %63 = dma.hbm_to_vmem [thread:$0]  %s5, 1024, %s58, [#allocation9], 64, 64, 4
    $region25: #{dqn_forward.1} parent=1 // pred_fallthru
      _
    // Predicated region
    $region26: #{dqn_forward.1} parent=1 // pred_check
      _
    $region27: #{dqn_forward.1} parent=1 // pred_check_branch
      %65 = sbr.rel (0) target = $region29
    $region28: #{dqn_forward.1} parent=1 // pred_region
      _
    $region29: #{dqn_forward.1} parent=1 // pred_fallthru
      _
    // Predicated region
    $region30: #{dqn_forward.1} parent=1 // pred_check
      _
    $region31: #{dqn_forward.1} parent=1 // pred_check_branch
      %67 = sbr.rel (0) target = $region33
    $region32: #{dqn_forward.1} parent=1 // pred_region
      %68 = dma.done [#allocation3], 32
    $region33: #{dqn_forward.1} parent=1 // pred_fallthru
      _
    // Predicated region
    $region34: #{dqn_forward.1} parent=1 // pred_check
      _
    $region35: #{dqn_forward.1} parent=1 // pred_check_branch
      %70 = sbr.rel (0) target = $region37
    $region36: #{dqn_forward.1} parent=1 // pred_region
      %71 = dma.done [#allocation6], 64
    $region37: #{dqn_forward.1} parent=1 // pred_fallthru
      _
    // Predicated region
    $region38: #{dqn_forward.1} parent=1 // pred_check
      _
    $region39: #{dqn_forward.1} parent=1 // pred_check_branch
      %73 = sbr.rel (0) target = $region41
    $region40: #{dqn_forward.1} parent=1 // pred_region
      %74 = dma.done [#allocation6], 1024
    $region41: #{dqn_forward.1} parent=1 // pred_fallthru
      _
    // Predicated region
    $region42: #{dqn_forward.1} parent=1 // pred_check
      _
    $region43: #{dqn_forward.1} parent=1 // pred_check_branch
      %76 = sbr.rel (0) target = $region45
    $region44: #{dqn_forward.1} parent=1 // pred_region
      %77 = dma.done [#allocation9], 1024
    $region45: #{dqn_forward.1} parent=1 // pred_fallthru
      _
    %v79 = vld [vmem:[#allocation2] sm:$0x3]
    %v80 = vld [vmem:[#allocation5] sm:$0xf]
    %v81 = vld [vmem:[%s2] sm:$0x1]
    %83 = vset.pattern.permute.xlu0 0
    %84 = vperm.xlu0 %83, %v79
    %v85 = vpop.permute.xlu0 %84
    %v87 = vlaneseq
    %v88 = vshrl.u32 %v87, 7
    %v89 = vsub.s32 0, %v88
    %v90 = vrot.slane %v80, %v89
    %v91 = vmul.f32 %v85, %v90
    %v93 = vlaneseq
    %v94 = vshrl.u32 %v93, 7
    %v95 = vsub.s32 0, %v94
    %v96 = vrot.slane %v81, %v95
    %v98 = vadd.f32 %v96, %v91
    %99 = vset.pattern.permute.xlu0 1
    %100 = vperm.xlu0 %99, %v79
    %v101 = vpop.permute.xlu0 %100
    %v103 = vlaneseq
    %v104 = vshrl.u32 %v103, 7
    %v105 = vsub.s32 1, %v104
    %v106 = vrot.slane %v80, %v105
    %v107 = vmul.f32 %v101, %v106
    %v108 = vadd.f32 %v98, %v107
    %109 = vset.pattern.permute.xlu0 2
    %110 = vperm.xlu0 %109, %v79
    %v111 = vpop.permute.xlu0 %110
    %v113 = vlaneseq
    %v114 = vshrl.u32 %v113, 7
    %v115 = vsub.s32 2, %v114
    %v116 = vrot.slane %v80, %v115
    %v117 = vmul.f32 %v111, %v116
    %v118 = vadd.f32 %v108, %v117
    %119 = vset.pattern.permute.xlu0 3
    %120 = vperm.xlu0 %119, %v79
    %v121 = vpop.permute.xlu0 %120
    %v123 = vlaneseq
    %v124 = vshrl.u32 %v123, 7
    %v125 = vsub.s32 3, %v124
    %v126 = vrot.slane %v80, %v125
    %v127 = vmul.f32 %v121, %v126
    %v128 = vadd.f32 %v118, %v127
    %v129 = vmax.f32 %v128, 0.0
    %v130 = vpack.c.bf16 %v129, %v129
    %v131 = vld [vmem:[#allocation7] sm:$0xf]
    %v132 = vld [vmem:[#allocation7 + $0x4] sm:$0xf]
    %v133 = vld [vmem:[#allocation7 + $0x8] sm:$0xf]
    %v134 = vld [vmem:[#allocation7 + $0xc] sm:$0xf]
    %v135 = vld [vmem:[#allocation7 + $0x10] sm:$0xf]
    %v136 = vld [vmem:[#allocation7 + $0x14] sm:$0xf]
    %v137 = vld [vmem:[#allocation7 + $0x18] sm:$0xf]
    %v138 = vld [vmem:[#allocation7 + $0x1c] sm:$0xf]
    %v139 = vld [vmem:[#allocation7 + $0x20] sm:$0xf]
    %v140 = vld [vmem:[#allocation7 + $0x24] sm:$0xf]
    %v141 = vld [vmem:[#allocation7 + $0x28] sm:$0xf]
    %v142 = vld [vmem:[#allocation7 + $0x2c] sm:$0xf]
    %v143 = vld [vmem:[#allocation7 + $0x30] sm:$0xf]
    %v144 = vld [vmem:[#allocation7 + $0x34] sm:$0xf]
    %v145 = vld [vmem:[#allocation7 + $0x38] sm:$0xf]
    %v146 = vld [vmem:[#allocation7 + $0x3c] sm:$0xf]
    %v147 = vld [vmem:[%s4] sm:$0x1]
    %v149 = vlaneseq
    %v150 = vshrl.u32 %v149, 7
    %v151 = vsub.s32 0, %v150
    %v152 = vrot.slane %v147, %v151
    %v170 = vunpack.c.l.b16 %v131
    %v171 = vunpack.c.l.b16 %v132
    %v172 = vunpack.c.l.b16 %v133
    %v173 = vunpack.c.l.b16 %v134
    %v174 = vunpack.c.l.b16 %v135
    %v175 = vunpack.c.l.b16 %v136
    %v176 = vunpack.c.l.b16 %v137
    %v177 = vunpack.c.l.b16 %v138
    %v178 = vunpack.c.l.b16 %v139
    %v179 = vunpack.c.l.b16 %v140
    %v180 = vunpack.c.l.b16 %v141
    %v181 = vunpack.c.l.b16 %v142
    %v182 = vunpack.c.l.b16 %v143
    %v183 = vunpack.c.l.b16 %v144
    %v184 = vunpack.c.l.b16 %v145
    %v185 = vunpack.c.l.b16 %v146
    %v186 = vpack.c.b16 %v171, %v170
    %v187 = vpack.c.b16 %v173, %v172
    %v188 = vpack.c.b16 %v175, %v174
    %v189 = vpack.c.b16 %v177, %v176
    %v190 = vpack.c.b16 %v179, %v178
    %v191 = vpack.c.b16 %v181, %v180
    %v192 = vpack.c.b16 %v183, %v182
    %v193 = vpack.c.b16 %v185, %v184
    %202 = vmatprep.subr.bf16.mxu0 0
    %203 = vmatpush1.bf16.msra.mxu0 %v186
    %204 = vmatprep.subr.bf16.mxu0 0
    %205 = vmatpush1.bf16.msra.mxu0 %v187
    %206 = vmatprep.subr.bf16.mxu0 0
    %207 = vmatpush1.bf16.msra.mxu0 %v188
    %208 = vmatprep.subr.bf16.mxu0 0
    %209 = vmatpush1.bf16.msra.mxu0 %v189
    %210 = vmatprep.subr.bf16.mxu0 0
    %211 = vmatpush1.bf16.msra.mxu0 %v190
    %212 = vmatprep.subr.bf16.mxu0 0
    %213 = vmatpush1.bf16.msra.mxu0 %v191
    %214 = vmatprep.subr.bf16.mxu0 0
    %215 = vmatpush1.bf16.msra.mxu0 %v192
    %216 = vmatprep.subr.bf16.mxu0 0
    %217 = vmatpush1.bf16.msra.mxu0 %v193
    %218 = vmatprep.subr.bf16.mxu0 0
    %219 = vmatpush1.bf16.msra.mxu0 0
    %220 = vmatprep.subr.bf16.mxu0 0
    %221 = vmatpush1.bf16.msra.mxu0 0
    %222 = vmatprep.subr.bf16.mxu0 0
    %223 = vmatpush1.bf16.msra.mxu0 0
    %224 = vmatprep.subr.bf16.mxu0 0
    %225 = vmatpush1.bf16.msra.mxu0 0
    %226 = vmatprep.subr.bf16.mxu0 0
    %227 = vmatpush1.bf16.msra.mxu0 0
    %228 = vmatprep.subr.bf16.mxu0 0
    %229 = vmatpush1.bf16.msra.mxu0 0
    %230 = vmatprep.subr.bf16.mxu0 0
    %231 = vmatpush1.bf16.msra.mxu0 0
    %232 = vmatprep.subr.bf16.mxu0 0
    %233 = vmatpush1.bf16.msra.mxu0 0
    %234 = vmatprep.mubr.bf16.mxu0 0
    %235 = vmatmul.mubr.bf16.gmra.mrb[0].mxu0 %v130
    %v236 = vpop.f32.mrb[0].mxu0
    %v237 = vadd.f32 %v152, %v236
    %v238 = vpop.f32.mrb[0].mxu0
    %v239 = vpop.f32.mrb[0].mxu0
    %v240 = vpop.f32.mrb[0].mxu0
    %241 = vdwg.mxu0
    %v242 = vmax.f32 %v237, 0.0
    %v243 = vpack.c.bf16 %v242, %v242
    %v244 = vld [vmem:[#allocation8] sm:$0xf]
    %v245 = vld [vmem:[#allocation8 + $0x4] sm:$0xf]
    %v246 = vld [vmem:[#allocation8 + $0x8] sm:$0xf]
    %v247 = vld [vmem:[#allocation8 + $0xc] sm:$0xf]
    %v248 = vld [vmem:[#allocation8 + $0x10] sm:$0xf]
    %v249 = vld [vmem:[#allocation8 + $0x14] sm:$0xf]
    %v250 = vld [vmem:[#allocation8 + $0x18] sm:$0xf]
    %v251 = vld [vmem:[#allocation8 + $0x1c] sm:$0xf]
    %v252 = vld [vmem:[#allocation8 + $0x20] sm:$0xf]
    %v253 = vld [vmem:[#allocation8 + $0x24] sm:$0xf]
    %v254 = vld [vmem:[#allocation8 + $0x28] sm:$0xf]
    %v255 = vld [vmem:[#allocation8 + $0x2c] sm:$0xf]
    %v256 = vld [vmem:[#allocation8 + $0x30] sm:$0xf]
    %v257 = vld [vmem:[#allocation8 + $0x34] sm:$0xf]
    %v258 = vld [vmem:[#allocation8 + $0x38] sm:$0xf]
    %v259 = vld [vmem:[#allocation8 + $0x3c] sm:$0xf]
    %v260 = vld [vmem:[%s6] sm:$0x1]
    %v262 = vlaneseq
    %v263 = vshrl.u32 %v262, 7
    %v264 = vsub.s32 0, %v263
    %v265 = vrot.slane %v260, %v264
    %v283 = vunpack.c.l.b16 %v244
    %v284 = vunpack.c.l.b16 %v245
    %v285 = vunpack.c.l.b16 %v246
    %v286 = vunpack.c.l.b16 %v247
    %v287 = vunpack.c.l.b16 %v248
    %v288 = vunpack.c.l.b16 %v249
    %v289 = vunpack.c.l.b16 %v250
    %v290 = vunpack.c.l.b16 %v251
    %v291 = vunpack.c.l.b16 %v252
    %v292 = vunpack.c.l.b16 %v253
    %v293 = vunpack.c.l.b16 %v254
    %v294 = vunpack.c.l.b16 %v255
    %v295 = vunpack.c.l.b16 %v256
    %v296 = vunpack.c.l.b16 %v257
    %v297 = vunpack.c.l.b16 %v258
    %v298 = vunpack.c.l.b16 %v259
    %v299 = vpack.c.b16 %v284, %v283
    %v300 = vpack.c.b16 %v286, %v285
    %v301 = vpack.c.b16 %v288, %v287
    %v302 = vpack.c.b16 %v290, %v289
    %v303 = vpack.c.b16 %v292, %v291
    %v304 = vpack.c.b16 %v294, %v293
    %v305 = vpack.c.b16 %v296, %v295
    %v306 = vpack.c.b16 %v298, %v297
    %315 = vmatprep.subr.bf16.mxu0 0
    %316 = vmatpush1.bf16.msra.mxu0 %v299
    %317 = vmatprep.subr.bf16.mxu0 0
    %318 = vmatpush1.bf16.msra.mxu0 %v300
    %319 = vmatprep.subr.bf16.mxu0 0
    %320 = vmatpush1.bf16.msra.mxu0 %v301
    %321 = vmatprep.subr.bf16.mxu0 0
    %322 = vmatpush1.bf16.msra.mxu0 %v302
    %323 = vmatprep.subr.bf16.mxu0 0
    %324 = vmatpush1.bf16.msra.mxu0 %v303
    %325 = vmatprep.subr.bf16.mxu0 0
    %326 = vmatpush1.bf16.msra.mxu0 %v304
    %327 = vmatprep.subr.bf16.mxu0 0
    %328 = vmatpush1.bf16.msra.mxu0 %v305
    %329 = vmatprep.subr.bf16.mxu0 0
    %330 = vmatpush1.bf16.msra.mxu0 %v306
    %331 = vmatprep.subr.bf16.mxu0 0
    %332 = vmatpush1.bf16.msra.mxu0 0
    %333 = vmatprep.subr.bf16.mxu0 0
    %334 = vmatpush1.bf16.msra.mxu0 0
    %335 = vmatprep.subr.bf16.mxu0 0
    %336 = vmatpush1.bf16.msra.mxu0 0
    %337 = vmatprep.subr.bf16.mxu0 0
    %338 = vmatpush1.bf16.msra.mxu0 0
    %339 = vmatprep.subr.bf16.mxu0 0
    %340 = vmatpush1.bf16.msra.mxu0 0
    %341 = vmatprep.subr.bf16.mxu0 0
    %342 = vmatpush1.bf16.msra.mxu0 0
    %343 = vmatprep.subr.bf16.mxu0 0
    %344 = vmatpush1.bf16.msra.mxu0 0
    %345 = vmatprep.subr.bf16.mxu0 0
    %346 = vmatpush1.bf16.msra.mxu0 0
    %347 = vmatprep.mubr.bf16.mxu0 0
    %348 = vmatmul.mubr.bf16.gmra.mrb[0].mxu0 %v243
    %v349 = vpop.f32.mrb[0].mxu0
    %v350 = vadd.f32 %v265, %v349
    %v351 = vpop.f32.mrb[0].mxu0
    %v352 = vpop.f32.mrb[0].mxu0
    %v353 = vpop.f32.mrb[0].mxu0
    %354 = vdwg.mxu0
    %vm355 = vcmask 9216
    %356 = vst.msk [vmem:[#allocation10] sm:$0x3] %vm355, %v350
    // Predicated region
    $region46: #{dqn_forward.1} parent=1 // pred_check
      _
    $region47: #{dqn_forward.1} parent=1 // pred_check_branch
      %358 = sbr.rel (0) target = $region49
    $region48: #{dqn_forward.1} parent=1 // pred_region
      %s360 = ssub.s32 32, 32
      %361 = vsyncadd [#allocation4], %s360
      %s363 = sshll.u32 [#allocation10], 4
      %s364 = int_to_ptr.vmem [resolvable:$true] %s363
      %366 = dma.vmem_to_hbm [thread:$0]  %s364, 32, %s7, [#allocation4]
    $region49: #{dqn_forward.1} parent=1 // pred_fallthru
      _
    // Predicated region
    $region50: #{dqn_forward.1} parent=1 // pred_check
      _
    $region51: #{dqn_forward.1} parent=1 // pred_check_branch
      %368 = sbr.rel (0) target = $region53
    $region52: #{dqn_forward.1} parent=1 // pred_region
      %369 = dma.done [#allocation4], 32
    $region53: #{dqn_forward.1} parent=1 // pred_fallthru
      _
    %370 = vsyncpa [#allocation3], 1
    %371 = vsyncpa [#allocation6], 1
    %372 = vsyncpa [#allocation9], 1
    %373 = vsyncpa [#allocation4], 1

</llo_original>
